<compile_context>
chip_gen: v5e
topology: v5e:2x2
jax: 0.10.0
libtpu: 0.0.40
codegen_flags: <defaults>
</compile_context>

<pallas_src>
import functools

import jax
import jax.numpy as jnp
from jax import lax
from jax.experimental import pallas as pl
from jax.experimental.pallas import tpu as pltpu


def _pool_kernel(x_ref, avg_ref, mx_ref, sum_acc, max_acc, *,
                 hw_total, thw, lane_w, n_chunks, needs_mask, c_sub):
    """Streaming avg/max pooling over the flattened spatial axis.

    x_ref   : (tb, tc, thw)     native-dtype spatial tile of x
    avg_ref : (1, tb, tc)       f32 mean  (written on the last spatial step)
    mx_ref  : (1, tb, tc)       f32 max   (written on the last spatial step)
    sum_acc : (tb, tc, lane_w)  f32 lane-resident running sums
    max_acc : (tb, tc, lane_w)  lane-resident running maxes (bf16 for bf16 x)
    """
    s = pl.program_id(2)
    n_s = pl.num_programs(2)
    _, tc, _ = sum_acc.shape
    n_cb = tc // c_sub

    # ---- init accumulators at the first spatial step of each (b, c) block ---
    @pl.when(s == 0)
    def _init():
        sum_acc[...] = jnp.zeros(sum_acc.shape, jnp.float32)
        max_acc[...] = jnp.full(max_acc.shape, -jnp.inf, max_acc.dtype)

    # ---- streaming update ----------------------------------------------------
    def accumulate(masked):
        # Outer loop over channel sub-blocks keeps the live accumulator slice
        # register-resident across all 128-lane chunks; sum/max scratch is
        # loaded and stored once per (tile, sub-block).
        def c_block(j, carry):
            c0 = pl.multiple_of(j * c_sub, c_sub)
            acc_s = sum_acc[:, pl.ds(c0, c_sub), :]
            acc_m = max_acc[:, pl.ds(c0, c_sub), :]
            for k in range(n_chunks):          # static: pure vreg-resident ops
                lo = k * lane_w
                xk = x_ref[:, pl.ds(c0, c_sub), lo:lo + lane_w]
                if masked:
                    lane = lax.broadcasted_iota(jnp.int32, xk.shape, 2)
                    valid = (s * thw + lo + lane) < hw_total
                    xs = jnp.where(valid, xk.astype(jnp.float32), 0.0)
                    xm = jnp.where(valid, xk, jnp.array(-jnp.inf, xk.dtype))
                else:
                    xs = xk.astype(jnp.float32)
                    xm = xk
                acc_s = acc_s + xs
                acc_m = jnp.maximum(acc_m, xm.astype(acc_m.dtype))
            sum_acc[:, pl.ds(c0, c_sub), :] = acc_s
            max_acc[:, pl.ds(c0, c_sub), :] = acc_m
            return carry

        lax.fori_loop(0, n_cb, c_block, 0, unroll=bool(n_cb <= 8))

    if needs_mask:
        # Only the final (partial) spatial tile pays for iota + selects.
        @pl.when(s < n_s - 1)
        def _interior():
            accumulate(masked=False)

        @pl.when(s == n_s - 1)
        def _tail():
            accumulate(masked=True)
    else:
        accumulate(masked=False)

    # ---- finalize: single deferred cross-lane reduce -------------------------
    @pl.when(s == n_s - 1)
    def _finalize():
        inv_hw = jnp.float32(1.0 / hw_total)
        avg_ref[0] = (jnp.sum(sum_acc[...], axis=-1) * inv_hw).astype(avg_ref.dtype)
        mx_ref[0] = jnp.max(max_acc[...].astype(jnp.float32), axis=-1).astype(mx_ref.dtype)


def _se_fc_kernel(avg_ref, mx_ref, w1_ref, w2_ref, o_ref):
    """Tiny epilogue: sigmoid(fc(avg) + fc(max)) with fc = W2 @ relu(W1 @ p)."""
    w1 = w1_ref[...]                            # (C, Cr)
    w2 = w2_ref[...]                            # (Cr, C)

    def fc(p):
        h = jnp.dot(p, w1, preferred_element_type=jnp.float32)
        h = jnp.maximum(h, 0.0)
        return jnp.dot(h, w2, preferred_element_type=jnp.float32)

    logits = fc(avg_ref[...]) + fc(mx_ref[...])
    gate = pl.reciprocal(1.0 + jnp.exp(-logits), approx=False)
    o_ref[...] = gate.astype(o_ref.dtype)


def _device_kind():
    try:
        return jax.devices()[0].device_kind.lower()
    except Exception:  # pragma: no cover - conservative fallback
        return ""


def channel_attention(x, w1, w2, *, target_tile_bytes=None):
    """ChannelAttention forward: sigmoid(fc(avg_pool(x)) + fc(max_pool(x))).

    x : (B, C, H, W) NCHW, any float dtype (streamed in its native dtype).
    w1: (C//r, C)  == fc[0].weight[:, :, 0, 0]
    w2: (C, C//r)  == fc[2].weight[:, :, 0, 0]
    Returns the (B, C, 1, 1) channel gate in x.dtype.
    """
    B, C, H, W = x.shape
    HW = H * W
    Cr = w1.shape[0]

    kind = _device_kind()
    is_v7 = "v7" in kind
    if target_tile_bytes is None:
        if is_v7:
            target_tile_bytes = 6 * 1024 * 1024   # 3.2 TB/s HBM: amortize step overhead
        elif "v5 lite" in kind or "v5e" in kind:
            target_tile_bytes = 2 * 1024 * 1024   # 16 MiB scoped-VMEM default, HBM-bound
        else:
            target_tile_bytes = 4 * 1024 * 1024

    # ---- batch / channel tiling ---------------------------------------------
    # (tb, tc) output blocks: tb must be %8 or ==B; partial edge blocks are
    # clipped on writeback, so B%8 / tc not dividing C never blow up scratch.
    tb = B if B < 8 else 8
    n_b = pl.cdiv(B, tb)

    if C < 8:
        tc = C
    else:
        tc = min((C // 8) * 8, 256)               # bound accumulator scratch for big C
        if is_v7 and n_b == 1 and pl.cdiv(C, tc) == 1 and C >= 16:
            # Small batch on a 2-TensorCore chip: halve the channel tile so the
            # "parallel" channel axis has extent >= 2.
            tc = max(8, ((C // 2 + 7) // 8) * 8)
    n_c = pl.cdiv(C, tc)

    # ---- spatial tiling: lane dim is always a multiple of 128 (or full HW) ---
    itemsize = jnp.dtype(x.dtype).itemsize
    if HW <= 128:
        thw, lane_w = HW, HW
    else:
        lanes = max(128, target_tile_bytes // (tb * tc * itemsize))
        thw = int(min((lanes // 128) * 128, (HW // 128) * 128))
        lane_w = 128
    n_s = pl.cdiv(HW, thw)
    needs_mask = (n_s * thw) != HW
    n_chunks = thw // lane_w

    # Channel sub-block: keep both live accumulator slices <= ~24 vregs.
    if tc <= 8:
        c_sub = tc
    else:
        c_sub = 8
        while (c_sub * 2 <= tc and tc % (c_sub * 2) == 0
               and tb * (c_sub * 2) * lane_w * 4 * 2 <= 96 * 1024):
            c_sub *= 2

    # Max accumulates exactly in bf16 for bf16 inputs (half the VALU/VMEM
    # traffic); the sum always accumulates in f32.
    max_dtype = x.dtype if x.dtype == jnp.bfloat16 else jnp.float32

    x_flat = x.reshape(B, C, HW)

    tile_bytes = tb * tc * thw * itemsize
    scratch_bytes = tb * tc * lane_w * (4 + jnp.dtype(max_dtype).itemsize)
    vmem_need = 2 * tile_bytes + scratch_bytes
    vmem_limit = int(min(max(2 * vmem_need, 32 << 20), 64 << 20))

    pool_kernel = functools.partial(
        _pool_kernel, hw_total=HW, thw=thw, lane_w=lane_w, n_chunks=n_chunks,
        needs_mask=needs_mask, c_sub=c_sub)

    # Pooled outputs are channel-blocked (n_c, B, tc) so the channel tile only
    # has to be a multiple of 8 (the last block dim is always the full extent).
    avg_blk, max_blk = pl.pallas_call(
        pool_kernel,
        out_shape=(jax.ShapeDtypeStruct((n_c, B, tc), jnp.float32),
                   jax.ShapeDtypeStruct((n_c, B, tc), jnp.float32)),
        grid_spec=pltpu.PrefetchScalarGridSpec(
            num_scalar_prefetch=0,
            grid=(n_b, n_c, n_s),
            in_specs=[pl.BlockSpec((tb, tc, thw), lambda b, c, s: (b, c, s))],
            out_specs=[pl.BlockSpec((1, tb, tc), lambda b, c, s: (c, b, 0)),
                       pl.BlockSpec((1, tb, tc), lambda b, c, s: (c, b, 0))],
            scratch_shapes=[pltpu.VMEM((tb, tc, lane_w), jnp.float32),
                            pltpu.VMEM((tb, tc, lane_w), max_dtype)]),
        compiler_params=pltpu.CompilerParams(
            dimension_semantics=("parallel", "parallel", "arbitrary"),
            vmem_limit_bytes=vmem_limit),
    )(x_flat)

    # Tiny glue: (n_c, B, tc) channel-blocked pools -> (B, C).
    avg = jnp.transpose(avg_blk, (1, 0, 2)).reshape(B, n_c * tc)[:, :C]
    mx = jnp.transpose(max_blk, (1, 0, 2)).reshape(B, n_c * tc)[:, :C]

    # ---- tiny FC -> ReLU -> FC -> add -> sigmoid micro-kernel ----------------
    w1_t = jnp.transpose(w1).astype(jnp.float32)   # (C, Cr)
    w2_t = jnp.transpose(w2).astype(jnp.float32)   # (Cr, C)

    tb2 = B if B <= 128 else 128
    n_b2 = pl.cdiv(B, tb2)
    gate = pl.pallas_call(
        _se_fc_kernel,
        out_shape=jax.ShapeDtypeStruct((B, C), x.dtype),
        grid_spec=pltpu.PrefetchScalarGridSpec(
            num_scalar_prefetch=0,
            grid=(n_b2,),
            in_specs=[pl.BlockSpec((tb2, C), lambda i: (i, 0)),
                      pl.BlockSpec((tb2, C), lambda i: (i, 0)),
                      pl.BlockSpec((C, Cr), lambda i: (0, 0)),
                      pl.BlockSpec((Cr, C), lambda i: (0, 0))],
            out_specs=pl.BlockSpec((tb2, C), lambda i: (i, 0))),
        compiler_params=pltpu.CompilerParams(
            dimension_semantics=("parallel",)),
    )(avg, mx, w1_t, w2_t)

    return gate.reshape(B, C, 1, 1)


def channel_attention_ref(x, w1, w2):
    """Pure-JAX reference mirroring the PyTorch forward."""
    B, C, H, W = x.shape
    xf = x.astype(jnp.float32)
    avg = jnp.mean(xf, axis=(2, 3))   # (B, C)
    mx = jnp.max(xf, axis=(2, 3))     # (B, C)

    def fc(p):
        return jnp.maximum(p @ w1.T, 0.0) @ w2.T

    out = jax.nn.sigmoid(fc(avg) + fc(mx))
    return out.reshape(B, C, 1, 1)


if __name__ == "__main__":
    root = jax.random.PRNGKey(0)
    k_a, k_b = jax.random.split(root, 2)

    def make_inputs(key, B, C, H, W, reduction, dtype=jnp.float32):
        kx, k1, k2 = jax.random.split(key, 3)
        Cr = max(1, C // reduction)
        x = jax.random.normal(kx, (B, C, H, W), dtype=jnp.float32).astype(dtype)
        w1 = jax.random.normal(k1, (Cr, C), jnp.float32) * (2.0 / C) ** 0.5
        w2 = jax.random.normal(k2, (C, Cr), jnp.float32) * (2.0 / Cr) ** 0.5
        return x, w1, w2

    # 1) Base case (module defaults: C=64, reduction=16 -> Cr=4).
    x, w1, w2 = make_inputs(k_a, 2, 64, 16, 16, 16)
    ref = channel_attention_ref(x, w1, w2)
    out = jax.block_until_ready(channel_attention(x, w1, w2))
    assert out.shape == (2, 64, 1, 1)
    assert jnp.allclose(out, ref, atol=1e-5, rtol=1e-5), "mismatch (default)"

    # 2) Tiny tile budget -> multi-step spatial streaming (accumulator path).
    out2 = jax.block_until_ready(
        channel_attention(x, w1, w2, target_tile_bytes=32 * 1024))
    assert jnp.allclose(out2, ref, atol=1e-5, rtol=1e-5), "mismatch (streamed)"

    # 3) Ragged everything: B=10 (partial batch block), C=20 (partial channel
    #    block), HW=324 (masked spatial tail), small tile budget.
    x3, w13, w23 = make_inputs(k_b, 10, 20, 18, 18, 4)
    ref3 = channel_attention_ref(x3, w13, w23)
    out3 = jax.block_until_ready(
        channel_attention(x3, w13, w23, target_tile_bytes=48 * 1024))
    assert jnp.allclose(out3, ref3, atol=1e-5, rtol=1e-5), "mismatch (ragged)"

    # 4) bf16 input: streamed in native dtype, f32 sum / bf16 max accumulators.
    xb = x.astype(jnp.bfloat16)
    refb = channel_attention_ref(xb.astype(jnp.float32), w1, w2)
    outb = jax.block_until_ready(channel_attention(xb, w1, w2))
    assert jnp.allclose(outb.astype(jnp.float32), refb,
                        atol=3e-2, rtol=3e-2), "mismatch (bf16)"

    print("KERNEL_OK")
</pallas_src>

<mosaic_0001>
module attributes {stable_mosaic.version = 11 : i64} {
  func.func @_pool_kernel(%arg0: i32, %arg1: i32, %arg2: i32, %arg3: memref<2x64x256xf32, #tpu.memory_space<vmem>>, %arg4: memref<1x2x64xf32, #tpu.memory_space<vmem>>, %arg5: memref<1x2x64xf32, #tpu.memory_space<vmem>>, %arg6: memref<2x64x128xf32, #tpu.memory_space<vmem>>, %arg7: memref<2x64x128xf32, #tpu.memory_space<vmem>>) attributes {dimension_semantics = [#tpu.dimension_semantics<parallel>, #tpu.dimension_semantics<parallel>, #tpu.dimension_semantics<arbitrary>], iteration_bounds = array<i64: 1, 1, 1>, scalar_prefetch = 0 : i64, scratch_operands = 2 : i64, tpu.core_type = #tpu.core_type<tc>, window_params = [{transform_indices = @transform_0, window_bounds = array<i64: 2, 64, 256>}, {transform_indices = @transform_1, window_bounds = array<i64: 1, 2, 64>}, {transform_indices = @transform_2, window_bounds = array<i64: 1, 2, 64>}]} {
    %c0_i32 = arith.constant 0 : i32
    %0 = arith.cmpi eq, %arg2, %c0_i32 : i32
    %1 = arith.extui %0 : i1 to i32
    %c0_i32_0 = arith.constant 0 : i32
    %2 = arith.cmpi ne, %1, %c0_i32_0 : i32
    scf.if %2 {
      %cst = arith.constant 0.000000e+00 : f32
      %42 = vector.broadcast %cst : f32 to vector<2x64x128xf32>
      %c0_27 = arith.constant 0 : index
      %c0_28 = arith.constant 0 : index
      %c0_29 = arith.constant 0 : index
      %43 = vector.load %arg6[%c0_27, %c0_28, %c0_29] : memref<2x64x128xf32, #tpu.memory_space<vmem>>, vector<2x64x128xf32>
      tpu.vector_store %arg6[%c0_27, %c0_28, %c0_29], %42 {strides = array<i32>} : memref<2x64x128xf32, #tpu.memory_space<vmem>>, vector<2x64x128xf32>,
      %cst_30 = arith.constant 0xFF800000 : f32
      %44 = vector.broadcast %cst_30 : f32 to vector<2x64x128xf32>
      %c0_31 = arith.constant 0 : index
      %c0_32 = arith.constant 0 : index
      %c0_33 = arith.constant 0 : index
      %45 = vector.load %arg7[%c0_31, %c0_32, %c0_33] : memref<2x64x128xf32, #tpu.memory_space<vmem>>, vector<2x64x128xf32>
      tpu.vector_store %arg7[%c0_31, %c0_32, %c0_33], %44 {strides = array<i32>} : memref<2x64x128xf32, #tpu.memory_space<vmem>>, vector<2x64x128xf32>,
    } else {
    }
    %c0_i32_1 = arith.constant 0 : i32
    %c32_i32 = arith.constant 32 : i32
    %3 = arith.muli %c0_i32_1, %c32_i32 : i32
    %4 = tpu.assume_multiple %3, 32 : i32
    %c0 = arith.constant 0 : index
    %5 = arith.index_cast %4 : i32 to index
    %c0_2 = arith.constant 0 : index
    %6 = vector.load %arg6[%c0, %5, %c0_2] : memref<2x64x128xf32, #tpu.memory_space<vmem>>, vector<2x32x128xf32>
    %c0_3 = arith.constant 0 : index
    %7 = arith.index_cast %4 : i32 to index
    %c0_4 = arith.constant 0 : index
    %8 = vector.load %arg7[%c0_3, %7, %c0_4] : memref<2x64x128xf32, #tpu.memory_space<vmem>>, vector<2x32x128xf32>
    %c0_5 = arith.constant 0 : index
    %9 = arith.index_cast %4 : i32 to index
    %c0_6 = arith.constant 0 : index
    %10 = vector.load %arg3[%c0_5, %9, %c0_6] : memref<2x64x256xf32, #tpu.memory_space<vmem>>, vector<2x32x128xf32>
    %11 = arith.addf %6, %10 : vector<2x32x128xf32>
    %12 = arith.maximumf %8, %10 : vector<2x32x128xf32>
    %c0_7 = arith.constant 0 : index
    %13 = arith.index_cast %4 : i32 to index
    %c128 = arith.constant 128 : index
    %14 = vector.load %arg3[%c0_7, %13, %c128] : memref<2x64x256xf32, #tpu.memory_space<vmem>>, vector<2x32x128xf32>
    %15 = arith.addf %11, %14 : vector<2x32x128xf32>
    %16 = arith.maximumf %12, %14 : vector<2x32x128xf32>
    %c0_8 = arith.constant 0 : index
    %17 = arith.index_cast %4 : i32 to index
    %c0_9 = arith.constant 0 : index
    %18 = vector.load %arg6[%c0_8, %17, %c0_9] : memref<2x64x128xf32, #tpu.memory_space<vmem>>, vector<2x32x128xf32>
    tpu.vector_store %arg6[%c0_8, %17, %c0_9], %15 {strides = array<i32>} : memref<2x64x128xf32, #tpu.memory_space<vmem>>, vector<2x32x128xf32>,
    %c0_10 = arith.constant 0 : index
    %19 = arith.index_cast %4 : i32 to index
    %c0_11 = arith.constant 0 : index
    %20 = vector.load %arg7[%c0_10, %19, %c0_11] : memref<2x64x128xf32, #tpu.memory_space<vmem>>, vector<2x32x128xf32>
    tpu.vector_store %arg7[%c0_10, %19, %c0_11], %16 {strides = array<i32>} : memref<2x64x128xf32, #tpu.memory_space<vmem>>, vector<2x32x128xf32>,
    %c1_i32 = arith.constant 1 : i32
    %c32_i32_12 = arith.constant 32 : i32
    %21 = arith.muli %c1_i32, %c32_i32_12 : i32
    %22 = tpu.assume_multiple %21, 32 : i32
    %c0_13 = arith.constant 0 : index
    %23 = arith.index_cast %22 : i32 to index
    %c0_14 = arith.constant 0 : index
    %24 = vector.load %arg6[%c0_13, %23, %c0_14] : memref<2x64x128xf32, #tpu.memory_space<vmem>>, vector<2x32x128xf32>
    %c0_15 = arith.constant 0 : index
    %25 = arith.index_cast %22 : i32 to index
    %c0_16 = arith.constant 0 : index
    %26 = vector.load %arg7[%c0_15, %25, %c0_16] : memref<2x64x128xf32, #tpu.memory_space<vmem>>, vector<2x32x128xf32>
    %c0_17 = arith.constant 0 : index
    %27 = arith.index_cast %22 : i32 to index
    %c0_18 = arith.constant 0 : index
    %28 = vector.load %arg3[%c0_17, %27, %c0_18] : memref<2x64x256xf32, #tpu.memory_space<vmem>>, vector<2x32x128xf32>
    %29 = arith.addf %24, %28 : vector<2x32x128xf32>
    %30 = arith.maximumf %26, %28 : vector<2x32x128xf32>
    %c0_19 = arith.constant 0 : index
    %31 = arith.index_cast %22 : i32 to index
    %c128_20 = arith.constant 128 : index
    %32 = vector.load %arg3[%c0_19, %31, %c128_20] : memref<2x64x256xf32, #tpu.memory_space<vmem>>, vector<2x32x128xf32>
    %33 = arith.addf %29, %32 : vector<2x32x128xf32>
    %34 = arith.maximumf %30, %32 : vector<2x32x128xf32>
    %c0_21 = arith.constant 0 : index
    %35 = arith.index_cast %22 : i32 to index
    %c0_22 = arith.constant 0 : index
    %36 = vector.load %arg6[%c0_21, %35, %c0_22] : memref<2x64x128xf32, #tpu.memory_space<vmem>>, vector<2x32x128xf32>
    tpu.vector_store %arg6[%c0_21, %35, %c0_22], %33 {strides = array<i32>} : memref<2x64x128xf32, #tpu.memory_space<vmem>>, vector<2x32x128xf32>,
    %c0_23 = arith.constant 0 : index
    %37 = arith.index_cast %22 : i32 to index
    %c0_24 = arith.constant 0 : index
    %38 = vector.load %arg7[%c0_23, %37, %c0_24] : memref<2x64x128xf32, #tpu.memory_space<vmem>>, vector<2x32x128xf32>
    tpu.vector_store %arg7[%c0_23, %37, %c0_24], %34 {strides = array<i32>} : memref<2x64x128xf32, #tpu.memory_space<vmem>>, vector<2x32x128xf32>,
    %c2_i32 = arith.constant 2 : i32
    %c0_i32_25 = arith.constant 0 : i32
    %39 = arith.cmpi eq, %arg2, %c0_i32_25 : i32
    %40 = arith.extui %39 : i1 to i32
    %c0_i32_26 = arith.constant 0 : i32
    %41 = arith.cmpi ne, %40, %c0_i32_26 : i32
    scf.if %41 {
      %c0_27 = arith.constant 0 : index
      %c0_28 = arith.constant 0 : index
      %c0_29 = arith.constant 0 : index
      %42 = vector.load %arg6[%c0_27, %c0_28, %c0_29] : memref<2x64x128xf32, #tpu.memory_space<vmem>>, vector<2x64x128xf32>
      %cst = arith.constant dense<0.000000e+00> : vector<2x64xf32>
      %43 = vector.multi_reduction <add>, %42, %cst [2] : vector<2x64x128xf32> to vector<2x64xf32>
      %cst_30 = arith.constant 3.906250e-03 : f32
      %44 = vector.broadcast %cst_30 : f32 to vector<2x64xf32>
      %45 = arith.mulf %43, %44 : vector<2x64xf32>
      %c0_31 = arith.constant 0 : index
      %c0_32 = arith.constant 0 : index
      %c0_33 = arith.constant 0 : index
      %46 = vector.load %arg4[%c0_31, %c0_32, %c0_33] : memref<1x2x64xf32, #tpu.memory_space<vmem>>, vector<1x2x64xf32>
      %47 = vector.shape_cast %46 : vector<1x2x64xf32> to vector<2x64xf32>
      %48 = vector.shape_cast %45 : vector<2x64xf32> to vector<1x2x64xf32>
      tpu.vector_store %arg4[%c0_31, %c0_32, %c0_33], %48 {strides = array<i32>} : memref<1x2x64xf32, #tpu.memory_space<vmem>>, vector<1x2x64xf32>,
      %c0_34 = arith.constant 0 : index
      %c0_35 = arith.constant 0 : index
      %c0_36 = arith.constant 0 : index
      %49 = vector.load %arg7[%c0_34, %c0_35, %c0_36] : memref<2x64x128xf32, #tpu.memory_space<vmem>>, vector<2x64x128xf32>
      %cst_37 = arith.constant dense<0xFF800000> : vector<2x64xf32>
      %50 = vector.multi_reduction <maximumf>, %49, %cst_37 [2] : vector<2x64x128xf32> to vector<2x64xf32>
      %c0_38 = arith.constant 0 : index
      %c0_39 = arith.constant 0 : index
      %c0_40 = arith.constant 0 : index
      %51 = vector.load %arg5[%c0_38, %c0_39, %c0_40] : memref<1x2x64xf32, #tpu.memory_space<vmem>>, vector<1x2x64xf32>
      %52 = vector.shape_cast %51 : vector<1x2x64xf32> to vector<2x64xf32>
      %53 = vector.shape_cast %50 : vector<2x64xf32> to vector<1x2x64xf32>
      tpu.vector_store %arg5[%c0_38, %c0_39, %c0_40], %53 {strides = array<i32>} : memref<1x2x64xf32, #tpu.memory_space<vmem>>, vector<1x2x64xf32>,
    } else {
    }
    return
  }
  func.func @transform_0(%arg0: i32, %arg1: i32, %arg2: i32) -> (i32, i32, i32) {
    %c0_i32 = arith.constant 0 : i32
    return %arg0, %arg1, %arg2 : i32, i32, i32
  }
  func.func @transform_1(%arg0: i32, %arg1: i32, %arg2: i32) -> (i32, i32, i32) {
    %c0_i32 = arith.constant 0 : i32
    %c0_i32_0 = arith.constant 0 : i32
    return %arg1, %arg0, %c0_i32 : i32, i32, i32
  }
  func.func @transform_2(%arg0: i32, %arg1: i32, %arg2: i32) -> (i32, i32, i32) {
    %c0_i32 = arith.constant 0 : i32
    %c0_i32_0 = arith.constant 0 : i32
    return %arg1, %arg0, %c0_i32 : i32, i32, i32
  }
}

</mosaic_0001>

<llo_original>
// kernel: tpu_custom_call.1
$region0: #{tpu_custom_call.1}
  #allocation0 [shape = 'u32[]', space=smem, size = 0x4, offset = 0x4, fixed_abs, tag = 'smem constant byte address 0x4 - core index']
  #allocation1 [shape = 'u32[72,128]{1,0:T(1,128)}', space=vmem, size = 0x9000, scoped, tag = 'internal scratch']
  #allocation2 [shape = 'f32[2,64,128]{2,1,0:T(8,128)}', space=vmem, size = 0x10000, scoped, tag = 'scratch operand']
  #allocation3 [shape = 'f32[2,64,128]{2,1,0:T(8,128)}', space=vmem, size = 0x10000, scoped, tag = 'scratch operand']
  %s0 = inlined_call_operand.hbm [shape: f32[2,64,256], index: 0, kind: input, shape index: {}]
  %s1 = inlined_call_operand.hbm [shape: f32[1,2,64], index: 1, kind: output, shape index: {0}]
  %s2 = inlined_call_operand.hbm [shape: f32[1,2,64], index: 2, kind: output, shape index: {1}]
  %3 = xla_tuple %s1, %s2
  %s4 = sld [smem:[#allocation0]]
  $region34: #{tpu_custom_call.1} parent=0
    _
  %s6 = ssub.s32 1, %s4
  %s7 = scalar_select 0, %s6, %s4
  $region1: #{tpu_custom_call.1} parent=0
    #allocation4 [shape = 'u8[131072]{0}', space=vmem, size = 0x20000, scoped, tag = 'input window, operand 0, single buffered']
    #allocation5 [shape = 's32[1]{0}', space=sflag, size = 0x4, scoped, tag = 'scoped memory for tpu_custom_call.1']
    #allocation6 [shape = 's32[1]{0}', space=sflag, size = 0x4, scoped, tag = 'scoped memory for tpu_custom_call.1']
    #allocation7 [shape = 'u8[1024]{0}', space=vmem, size = 0x400, scoped, tag = 'output window, operand 0, single buffered']
    #allocation8 [shape = 'u8[1024]{0}', space=vmem, size = 0x400, scoped, tag = 'output window, operand 1, single buffered']
    #allocation9 [shape = 's32[1]{0}', space=sflag, size = 0x4, scoped, tag = 'scoped memory for tpu_custom_call.1']
    %8 = vsyncpa [#allocation5], 0
    %9 = vsyncpa [#allocation6], 0
    %10 = vsyncpa [#allocation9], 0
    // Predicated region
    $region2: #{tpu_custom_call.1} parent=1 // pred_check
      _
    $region3: #{tpu_custom_call.1} parent=1 // pred_check_branch
      %12 = sbr.rel (0) target = $region5
    $region4: #{tpu_custom_call.1} parent=1 // pred_region
      %14 = vsyncadd [#allocation5], 0
      %s15 = sshll.u32 %s0, 4
      %s16 = int_to_ptr.hbm [resolvable:$true] %s15
      %s17 = sshll.u32 [#allocation4], 4
      %s18 = int_to_ptr.vmem [resolvable:$true] %s17
      %23 = dma.hbm_to_vmem [thread:$0]  %s16, 4096, %s18, [#allocation5], 256, 256, 16
    $region5: #{tpu_custom_call.1} parent=1 // pred_fallthru
      _
    // Predicated region
    $region6: #{tpu_custom_call.1} parent=1 // pred_check
      _
    $region7: #{tpu_custom_call.1} parent=1 // pred_check_branch
      %25 = sbr.rel (0) target = $region9
    $region8: #{tpu_custom_call.1} parent=1 // pred_region
      %27 = dma.done [#allocation5], 4096
    $region9: #{tpu_custom_call.1} parent=1 // pred_fallthru
      _
    %p28 = scmp.eq.s32.totalorder 0, 0
    // Predicated region
    $region10: #{tpu_custom_call.1} parent=1 // pred_check
      %p29 = pneg %p28
    $region11: #{tpu_custom_call.1} parent=1 // pred_check_branch
      %31 = sbr.rel (%p29) target = $region13
    $region12: #{tpu_custom_call.1} parent=1 // pred_region
      %32 = vst [vmem:[#allocation2] sm:$0xff] 0.0
      %33 = vst [vmem:[#allocation2 + $0x8] sm:$0xff] 0.0
      %34 = vst [vmem:[#allocation2 + $0x10] sm:$0xff] 0.0
      %35 = vst [vmem:[#allocation2 + $0x18] sm:$0xff] 0.0
      %36 = vst [vmem:[#allocation2 + $0x20] sm:$0xff] 0.0
      %37 = vst [vmem:[#allocation2 + $0x28] sm:$0xff] 0.0
      %38 = vst [vmem:[#allocation2 + $0x30] sm:$0xff] 0.0
      %39 = vst [vmem:[#allocation2 + $0x38] sm:$0xff] 0.0
      %40 = vst [vmem:[#allocation2 + $0x40] sm:$0xff] 0.0
      %41 = vst [vmem:[#allocation2 + $0x48] sm:$0xff] 0.0
      %42 = vst [vmem:[#allocation2 + $0x50] sm:$0xff] 0.0
      %43 = vst [vmem:[#allocation2 + $0x58] sm:$0xff] 0.0
      %44 = vst [vmem:[#allocation2 + $0x60] sm:$0xff] 0.0
      %45 = vst [vmem:[#allocation2 + $0x68] sm:$0xff] 0.0
      %46 = vst [vmem:[#allocation2 + $0x70] sm:$0xff] 0.0
      %47 = vst [vmem:[#allocation2 + $0x78] sm:$0xff] 0.0
      %48 = vst [vmem:[#allocation3] sm:$0xff] -inf
      %49 = vst [vmem:[#allocation3 + $0x8] sm:$0xff] -inf
      %50 = vst [vmem:[#allocation3 + $0x10] sm:$0xff] -inf
      %51 = vst [vmem:[#allocation3 + $0x18] sm:$0xff] -inf
      %52 = vst [vmem:[#allocation3 + $0x20] sm:$0xff] -inf
      %53 = vst [vmem:[#allocation3 + $0x28] sm:$0xff] -inf
      %54 = vst [vmem:[#allocation3 + $0x30] sm:$0xff] -inf
      %55 = vst [vmem:[#allocation3 + $0x38] sm:$0xff] -inf
      %56 = vst [vmem:[#allocation3 + $0x40] sm:$0xff] -inf
      %57 = vst [vmem:[#allocation3 + $0x48] sm:$0xff] -inf
      %58 = vst [vmem:[#allocation3 + $0x50] sm:$0xff] -inf
      %59 = vst [vmem:[#allocation3 + $0x58] sm:$0xff] -inf
      %60 = vst [vmem:[#allocation3 + $0x60] sm:$0xff] -inf
      %61 = vst [vmem:[#allocation3 + $0x68] sm:$0xff] -inf
      %62 = vst [vmem:[#allocation3 + $0x70] sm:$0xff] -inf
      %63 = vst [vmem:[#allocation3 + $0x78] sm:$0xff] -inf
    $region13: #{tpu_custom_call.1} parent=1 // pred_fallthru
      _
    %v64 = vld [vmem:[#allocation2] sm:$0xff]
    %v65 = vld [vmem:[#allocation2 + $0x8] sm:$0xff]
    %v66 = vld [vmem:[#allocation2 + $0x10] sm:$0xff]
    %v67 = vld [vmem:[#allocation2 + $0x18] sm:$0xff]
    %v68 = vld [vmem:[#allocation2 + $0x40] sm:$0xff]
    %v69 = vld [vmem:[#allocation2 + $0x48] sm:$0xff]
    %v70 = vld [vmem:[#allocation2 + $0x50] sm:$0xff]
    %v71 = vld [vmem:[#allocation2 + $0x58] sm:$0xff]
    %v72 = vld [vmem:[#allocation3] sm:$0xff]
    %v73 = vld [vmem:[#allocation3 + $0x8] sm:$0xff]
    %v74 = vld [vmem:[#allocation3 + $0x10] sm:$0xff]
    %v75 = vld [vmem:[#allocation3 + $0x18] sm:$0xff]
    %v76 = vld [vmem:[#allocation3 + $0x40] sm:$0xff]
    %v77 = vld [vmem:[#allocation3 + $0x48] sm:$0xff]
    %v78 = vld [vmem:[#allocation3 + $0x50] sm:$0xff]
    %v79 = vld [vmem:[#allocation3 + $0x58] sm:$0xff]
    %s80 = smul.u32 0, 2
    %s81 = smul.addr %s80, 8
    %s82 = scalar_lea.vmem [#allocation4], %s81
    %v83 = vld [vmem:[%s82] sm:$0xff]
    %v84 = vld [vmem:[%s82 + $0x10] sm:$0xff]
    %v85 = vld [vmem:[%s82 + $0x20] sm:$0xff]
    %v86 = vld [vmem:[%s82 + $0x30] sm:$0xff]
    %v87 = vld [vmem:[%s82 + $0x80] sm:$0xff]
    %v88 = vld [vmem:[%s82 + $0x90] sm:$0xff]
    %v89 = vld [vmem:[%s82 + $0xa0] sm:$0xff]
    %v90 = vld [vmem:[%s82 + $0xb0] sm:$0xff]
    %v91 = vadd.f32 %v64, %v83
    %v92 = vadd.f32 %v65, %v84
    %v93 = vadd.f32 %v66, %v85
    %v94 = vadd.f32 %v67, %v86
    %v95 = vadd.f32 %v68, %v87
    %v96 = vadd.f32 %v69, %v88
    %v97 = vadd.f32 %v70, %v89
    %v98 = vadd.f32 %v71, %v90
    %v99 = vmax.f32 %v72, %v83
    %v100 = vmax.f32 %v73, %v84
    %v101 = vmax.f32 %v74, %v85
    %v102 = vmax.f32 %v75, %v86
    %v103 = vmax.f32 %v76, %v87
    %v104 = vmax.f32 %v77, %v88
    %v105 = vmax.f32 %v78, %v89
    %v106 = vmax.f32 %v79, %v90
    %v107 = vld [vmem:[%s82 + $0x8] sm:$0xff]
    %v108 = vld [vmem:[%s82 + $0x18] sm:$0xff]
    %v109 = vld [vmem:[%s82 + $0x28] sm:$0xff]
    %v110 = vld [vmem:[%s82 + $0x38] sm:$0xff]
    %v111 = vld [vmem:[%s82 + $0x88] sm:$0xff]
    %v112 = vld [vmem:[%s82 + $0x98] sm:$0xff]
    %v113 = vld [vmem:[%s82 + $0xa8] sm:$0xff]
    %v114 = vld [vmem:[%s82 + $0xb8] sm:$0xff]
    %v115 = vadd.f32 %v91, %v107
    %v116 = vadd.f32 %v92, %v108
    %v117 = vadd.f32 %v93, %v109
    %v118 = vadd.f32 %v94, %v110
    %v119 = vadd.f32 %v95, %v111
    %v120 = vadd.f32 %v96, %v112
    %v121 = vadd.f32 %v97, %v113
    %v122 = vadd.f32 %v98, %v114
    %v123 = vmax.f32 %v99, %v107
    %v124 = vmax.f32 %v100, %v108
    %v125 = vmax.f32 %v101, %v109
    %v126 = vmax.f32 %v102, %v110
    %v127 = vmax.f32 %v103, %v111
    %v128 = vmax.f32 %v104, %v112
    %v129 = vmax.f32 %v105, %v113
    %v130 = vmax.f32 %v106, %v114
    %131 = vst [vmem:[#allocation2] sm:$0xff] %v115
    %132 = vst [vmem:[#allocation2 + $0x8] sm:$0xff] %v116
    %133 = vst [vmem:[#allocation2 + $0x10] sm:$0xff] %v117
    %134 = vst [vmem:[#allocation2 + $0x18] sm:$0xff] %v118
    %135 = vst [vmem:[#allocation2 + $0x40] sm:$0xff] %v119
    %136 = vst [vmem:[#allocation2 + $0x48] sm:$0xff] %v120
    %137 = vst [vmem:[#allocation2 + $0x50] sm:$0xff] %v121
    %138 = vst [vmem:[#allocation2 + $0x58] sm:$0xff] %v122
    %139 = vst [vmem:[#allocation3] sm:$0xff] %v123
    %140 = vst [vmem:[#allocation3 + $0x8] sm:$0xff] %v124
    %141 = vst [vmem:[#allocation3 + $0x10] sm:$0xff] %v125
    %142 = vst [vmem:[#allocation3 + $0x18] sm:$0xff] %v126
    %143 = vst [vmem:[#allocation3 + $0x40] sm:$0xff] %v127
    %144 = vst [vmem:[#allocation3 + $0x48] sm:$0xff] %v128
    %145 = vst [vmem:[#allocation3 + $0x50] sm:$0xff] %v129
    %146 = vst [vmem:[#allocation3 + $0x58] sm:$0xff] %v130
    %s147 = scalar_lea.vmem [#allocation2], 32
    %v148 = vld [vmem:[%s147] sm:$0xff]
    %v149 = vld [vmem:[%s147 + $0x8] sm:$0xff]
    %v150 = vld [vmem:[%s147 + $0x10] sm:$0xff]
    %v151 = vld [vmem:[%s147 + $0x18] sm:$0xff]
    %v152 = vld [vmem:[%s147 + $0x40] sm:$0xff]
    %v153 = vld [vmem:[%s147 + $0x48] sm:$0xff]
    %v154 = vld [vmem:[%s147 + $0x50] sm:$0xff]
    %v155 = vld [vmem:[%s147 + $0x58] sm:$0xff]
    %s156 = scalar_lea.vmem [#allocation3], 32
    %v157 = vld [vmem:[%s156] sm:$0xff]
    %v158 = vld [vmem:[%s156 + $0x8] sm:$0xff]
    %v159 = vld [vmem:[%s156 + $0x10] sm:$0xff]
    %v160 = vld [vmem:[%s156 + $0x18] sm:$0xff]
    %v161 = vld [vmem:[%s156 + $0x40] sm:$0xff]
    %v162 = vld [vmem:[%s156 + $0x48] sm:$0xff]
    %v163 = vld [vmem:[%s156 + $0x50] sm:$0xff]
    %v164 = vld [vmem:[%s156 + $0x58] sm:$0xff]
    %s165 = smul.u32 4, 2
    %s166 = smul.addr %s165, 8
    %s167 = scalar_lea.vmem [#allocation4], %s166
    %v168 = vld [vmem:[%s167] sm:$0xff]
    %v169 = vld [vmem:[%s167 + $0x10] sm:$0xff]
    %v170 = vld [vmem:[%s167 + $0x20] sm:$0xff]
    %v171 = vld [vmem:[%s167 + $0x30] sm:$0xff]
    %v172 = vld [vmem:[%s167 + $0x80] sm:$0xff]
    %v173 = vld [vmem:[%s167 + $0x90] sm:$0xff]
    %v174 = vld [vmem:[%s167 + $0xa0] sm:$0xff]
    %v175 = vld [vmem:[%s167 + $0xb0] sm:$0xff]
    %v176 = vadd.f32 %v148, %v168
    %v177 = vadd.f32 %v149, %v169
    %v178 = vadd.f32 %v150, %v170
    %v179 = vadd.f32 %v151, %v171
    %v180 = vadd.f32 %v152, %v172
    %v181 = vadd.f32 %v153, %v173
    %v182 = vadd.f32 %v154, %v174
    %v183 = vadd.f32 %v155, %v175
    %v184 = vmax.f32 %v157, %v168
    %v185 = vmax.f32 %v158, %v169
    %v186 = vmax.f32 %v159, %v170
    %v187 = vmax.f32 %v160, %v171
    %v188 = vmax.f32 %v161, %v172
    %v189 = vmax.f32 %v162, %v173
    %v190 = vmax.f32 %v163, %v174
    %v191 = vmax.f32 %v164, %v175
    %v192 = vld [vmem:[%s167 + $0x8] sm:$0xff]
    %v193 = vld [vmem:[%s167 + $0x18] sm:$0xff]
    %v194 = vld [vmem:[%s167 + $0x28] sm:$0xff]
    %v195 = vld [vmem:[%s167 + $0x38] sm:$0xff]
    %v196 = vld [vmem:[%s167 + $0x88] sm:$0xff]
    %v197 = vld [vmem:[%s167 + $0x98] sm:$0xff]
    %v198 = vld [vmem:[%s167 + $0xa8] sm:$0xff]
    %v199 = vld [vmem:[%s167 + $0xb8] sm:$0xff]
    %v200 = vadd.f32 %v176, %v192
    %v201 = vadd.f32 %v177, %v193
    %v202 = vadd.f32 %v178, %v194
    %v203 = vadd.f32 %v179, %v195
    %v204 = vadd.f32 %v180, %v196
    %v205 = vadd.f32 %v181, %v197
    %v206 = vadd.f32 %v182, %v198
    %v207 = vadd.f32 %v183, %v199
    %v208 = vmax.f32 %v184, %v192
    %v209 = vmax.f32 %v185, %v193
    %v210 = vmax.f32 %v186, %v194
    %v211 = vmax.f32 %v187, %v195
    %v212 = vmax.f32 %v188, %v196
    %v213 = vmax.f32 %v189, %v197
    %v214 = vmax.f32 %v190, %v198
    %v215 = vmax.f32 %v191, %v199
    %216 = vst [vmem:[%s147] sm:$0xff] %v200
    %217 = vst [vmem:[%s147 + $0x8] sm:$0xff] %v201
    %218 = vst [vmem:[%s147 + $0x10] sm:$0xff] %v202
    %219 = vst [vmem:[%s147 + $0x18] sm:$0xff] %v203
    %220 = vst [vmem:[%s147 + $0x40] sm:$0xff] %v204
    %221 = vst [vmem:[%s147 + $0x48] sm:$0xff] %v205
    %222 = vst [vmem:[%s147 + $0x50] sm:$0xff] %v206
    %223 = vst [vmem:[%s147 + $0x58] sm:$0xff] %v207
    %224 = vst [vmem:[%s156] sm:$0xff] %v208
    %225 = vst [vmem:[%s156 + $0x8] sm:$0xff] %v209
    %226 = vst [vmem:[%s156 + $0x10] sm:$0xff] %v210
    %227 = vst [vmem:[%s156 + $0x18] sm:$0xff] %v211
    %228 = vst [vmem:[%s156 + $0x40] sm:$0xff] %v212
    %229 = vst [vmem:[%s156 + $0x48] sm:$0xff] %v213
    %230 = vst [vmem:[%s156 + $0x50] sm:$0xff] %v214
    %231 = vst [vmem:[%s156 + $0x58] sm:$0xff] %v215
    // Predicated region
    $region14: #{tpu_custom_call.1} parent=1 // pred_check
      %p232 = pneg %p28
    $region15: #{tpu_custom_call.1} parent=1 // pred_check_branch
      %234 = sbr.rel (%p232) target = $region17
    $region16: #{tpu_custom_call.1} parent=1 // pred_region
      %v235 = vld [vmem:[#allocation2] sm:$0xff]
      %v236 = vld [vmem:[#allocation2 + $0x8] sm:$0xff]
      %v237 = vld [vmem:[#allocation2 + $0x10] sm:$0xff]
      %v238 = vld [vmem:[#allocation2 + $0x18] sm:$0xff]
      %v239 = vld [vmem:[#allocation2 + $0x20] sm:$0xff]
      %v240 = vld [vmem:[#allocation2 + $0x28] sm:$0xff]
      %v241 = vld [vmem:[#allocation2 + $0x30] sm:$0xff]
      %v242 = vld [vmem:[#allocation2 + $0x38] sm:$0xff]
      %v243 = vld [vmem:[#allocation2 + $0x40] sm:$0xff]
      %v244 = vld [vmem:[#allocation2 + $0x48] sm:$0xff]
      %v245 = vld [vmem:[#allocation2 + $0x50] sm:$0xff]
      %v246 = vld [vmem:[#allocation2 + $0x58] sm:$0xff]
      %v247 = vld [vmem:[#allocation2 + $0x60] sm:$0xff]
      %v248 = vld [vmem:[#allocation2 + $0x68] sm:$0xff]
      %v249 = vld [vmem:[#allocation2 + $0x70] sm:$0xff]
      %v250 = vld [vmem:[#allocation2 + $0x78] sm:$0xff]
      %251 = vadd.xlane.f32.xlu0 %v235
      %v252 = vpop.xlane.xlu0 %251
      %253 = vadd.xlane.f32.xlu0 %v236
      %v254 = vpop.xlane.xlu0 %253
      %255 = vadd.xlane.f32.xlu0 %v237
      %v256 = vpop.xlane.xlu0 %255
      %257 = vadd.xlane.f32.xlu0 %v238
      %v258 = vpop.xlane.xlu0 %257
      %259 = vadd.xlane.f32.xlu0 %v239
      %v260 = vpop.xlane.xlu0 %259
      %261 = vadd.xlane.f32.xlu0 %v240
      %v262 = vpop.xlane.xlu0 %261
      %263 = vadd.xlane.f32.xlu0 %v241
      %v264 = vpop.xlane.xlu0 %263
      %265 = vadd.xlane.f32.xlu0 %v242
      %v266 = vpop.xlane.xlu0 %265
      %267 = vadd.xlane.f32.xlu0 %v243
      %v268 = vpop.xlane.xlu0 %267
      %269 = vadd.xlane.f32.xlu0 %v244
      %v270 = vpop.xlane.xlu0 %269
      %271 = vadd.xlane.f32.xlu0 %v245
      %v272 = vpop.xlane.xlu0 %271
      %273 = vadd.xlane.f32.xlu0 %v246
      %v274 = vpop.xlane.xlu0 %273
      %275 = vadd.xlane.f32.xlu0 %v247
      %v276 = vpop.xlane.xlu0 %275
      %277 = vadd.xlane.f32.xlu0 %v248
      %v278 = vpop.xlane.xlu0 %277
      %279 = vadd.xlane.f32.xlu0 %v249
      %v280 = vpop.xlane.xlu0 %279
      %281 = vadd.xlane.f32.xlu0 %v250
      %v282 = vpop.xlane.xlu0 %281
      %v283 = vmul.f32 %v252, 0.00390625
      %v284 = vmul.f32 %v254, 0.00390625
      %v285 = vmul.f32 %v256, 0.00390625
      %v286 = vmul.f32 %v258, 0.00390625
      %v287 = vmul.f32 %v260, 0.00390625
      %v288 = vmul.f32 %v262, 0.00390625
      %v289 = vmul.f32 %v264, 0.00390625
      %v290 = vmul.f32 %v266, 0.00390625
      %v291 = vmul.f32 %v268, 0.00390625
      %v292 = vmul.f32 %v270, 0.00390625
      %v293 = vmul.f32 %v272, 0.00390625
      %v294 = vmul.f32 %v274, 0.00390625
      %v295 = vmul.f32 %v276, 0.00390625
      %v296 = vmul.f32 %v278, 0.00390625
      %v297 = vmul.f32 %v280, 0.00390625
      %v298 = vmul.f32 %v282, 0.00390625
      %v315 = vlaneseq
      %v316 = vand.u32 %v315, 127
      %v317 = vperm.slane %v283, %v316
      %v318 = vadd.s32 %v316, 4294967288
      %v319 = vperm.slane %v284, %v318
      %vm320 = vcmask 130112
      %v321 = vsel %vm320, %v319, %v317
      %v322 = vadd.s32 %v316, 4294967280
      %v323 = vperm.slane %v285, %v322
      %vm324 = vcmask 195712
      %v325 = vsel %vm324, %v323, %v321
      %v326 = vadd.s32 %v316, 4294967272
      %v327 = vperm.slane %v286, %v326
      %vm328 = vcmask 261312
      %v329 = vsel %vm328, %v327, %v325
      %v330 = vadd.s32 %v316, 4294967264
      %v331 = vperm.slane %v287, %v330
      %vm332 = vcmask 326912
      %v333 = vsel %vm332, %v331, %v329
      %v334 = vadd.s32 %v316, 4294967256
      %v335 = vperm.slane %v288, %v334
      %vm336 = vcmask 392512
      %v337 = vsel %vm336, %v335, %v333
      %v338 = vadd.s32 %v316, 4294967248
      %v339 = vperm.slane %v289, %v338
      %vm340 = vcmask 458112
      %v341 = vsel %vm340, %v339, %v337
      %v342 = vadd.s32 %v316, 4294967240
      %v343 = vperm.slane %v290, %v342
      %vm344 = vcmask 523712
      %v345 = vsel %vm344, %v343, %v341
      %v346 = vperm.slane %v291, %v316
      %v347 = vperm.slane %v292, %v318
      %v348 = vsel %vm320, %v347, %v346
      %v349 = vperm.slane %v293, %v322
      %v350 = vsel %vm324, %v349, %v348
      %v351 = vperm.slane %v294, %v326
      %v352 = vsel %vm328, %v351, %v350
      %v353 = vperm.slane %v295, %v330
      %v354 = vsel %vm332, %v353, %v352
      %v355 = vperm.slane %v296, %v334
      %v356 = vsel %vm336, %v355, %v354
      %v357 = vperm.slane %v297, %v338
      %v358 = vsel %vm340, %v357, %v356
      %v359 = vperm.slane %v298, %v342
      %v360 = vsel %vm344, %v359, %v358
      %vm361 = vcmask 1041409
      %v362 = vsel %vm361, %v360, %v345
      %vm364 = vcmask 517120
      %365 = vst.msk [vmem:[#allocation7] sm:$0x3] %vm364, %v362
      %v366 = vld [vmem:[#allocation3] sm:$0xff]
      %v367 = vld [vmem:[#allocation3 + $0x8] sm:$0xff]
      %v368 = vld [vmem:[#allocation3 + $0x10] sm:$0xff]
      %v369 = vld [vmem:[#allocation3 + $0x18] sm:$0xff]
      %v370 = vld [vmem:[#allocation3 + $0x20] sm:$0xff]
      %v371 = vld [vmem:[#allocation3 + $0x28] sm:$0xff]
      %v372 = vld [vmem:[#allocation3 + $0x30] sm:$0xff]
      %v373 = vld [vmem:[#allocation3 + $0x38] sm:$0xff]
      %v374 = vld [vmem:[#allocation3 + $0x40] sm:$0xff]
      %v375 = vld [vmem:[#allocation3 + $0x48] sm:$0xff]
      %v376 = vld [vmem:[#allocation3 + $0x50] sm:$0xff]
      %v377 = vld [vmem:[#allocation3 + $0x58] sm:$0xff]
      %v378 = vld [vmem:[#allocation3 + $0x60] sm:$0xff]
      %v379 = vld [vmem:[#allocation3 + $0x68] sm:$0xff]
      %v380 = vld [vmem:[#allocation3 + $0x70] sm:$0xff]
      %v381 = vld [vmem:[#allocation3 + $0x78] sm:$0xff]
      %382 = vmax.xlane.f32.xlu0 %v366
      %v383 = vpop.xlane.xlu0 %382
      %384 = vmax.xlane.f32.xlu0 %v367
      %v385 = vpop.xlane.xlu0 %384
      %386 = vmax.xlane.f32.xlu0 %v368
      %v387 = vpop.xlane.xlu0 %386
      %388 = vmax.xlane.f32.xlu0 %v369
      %v389 = vpop.xlane.xlu0 %388
      %390 = vmax.xlane.f32.xlu0 %v370
      %v391 = vpop.xlane.xlu0 %390
      %392 = vmax.xlane.f32.xlu0 %v371
      %v393 = vpop.xlane.xlu0 %392
      %394 = vmax.xlane.f32.xlu0 %v372
      %v395 = vpop.xlane.xlu0 %394
      %396 = vmax.xlane.f32.xlu0 %v373
      %v397 = vpop.xlane.xlu0 %396
      %398 = vmax.xlane.f32.xlu0 %v374
      %v399 = vpop.xlane.xlu0 %398
      %400 = vmax.xlane.f32.xlu0 %v375
      %v401 = vpop.xlane.xlu0 %400
      %402 = vmax.xlane.f32.xlu0 %v376
      %v403 = vpop.xlane.xlu0 %402
      %404 = vmax.xlane.f32.xlu0 %v377
      %v405 = vpop.xlane.xlu0 %404
      %406 = vmax.xlane.f32.xlu0 %v378
      %v407 = vpop.xlane.xlu0 %406
      %408 = vmax.xlane.f32.xlu0 %v379
      %v409 = vpop.xlane.xlu0 %408
      %410 = vmax.xlane.f32.xlu0 %v380
      %v411 = vpop.xlane.xlu0 %410
      %412 = vmax.xlane.f32.xlu0 %v381
      %v413 = vpop.xlane.xlu0 %412
      %v430 = vperm.slane %v383, %v316
      %v431 = vperm.slane %v385, %v318
      %v432 = vsel %vm320, %v431, %v430
      %v433 = vperm.slane %v387, %v322
      %v434 = vsel %vm324, %v433, %v432
      %v435 = vperm.slane %v389, %v326
      %v436 = vsel %vm328, %v435, %v434
      %v437 = vperm.slane %v391, %v330
      %v438 = vsel %vm332, %v437, %v436
      %v439 = vperm.slane %v393, %v334
      %v440 = vsel %vm336, %v439, %v438
      %v441 = vperm.slane %v395, %v338
      %v442 = vsel %vm340, %v441, %v440
      %v443 = vperm.slane %v397, %v342
      %v444 = vsel %vm344, %v443, %v442
      %v445 = vperm.slane %v399, %v316
      %v446 = vperm.slane %v401, %v318
      %v447 = vsel %vm320, %v446, %v445
      %v448 = vperm.slane %v403, %v322
      %v449 = vsel %vm324, %v448, %v447
      %v450 = vperm.slane %v405, %v326
      %v451 = vsel %vm328, %v450, %v449
      %v452 = vperm.slane %v407, %v330
      %v453 = vsel %vm332, %v452, %v451
      %v454 = vperm.slane %v409, %v334
      %v455 = vsel %vm336, %v454, %v453
      %v456 = vperm.slane %v411, %v338
      %v457 = vsel %vm340, %v456, %v455
      %v458 = vperm.slane %v413, %v342
      %v459 = vsel %vm344, %v458, %v457
      %v460 = vsel %vm361, %v459, %v444
      %462 = vst.msk [vmem:[#allocation8] sm:$0x3] %vm364, %v460
    $region17: #{tpu_custom_call.1} parent=1 // pred_fallthru
      _
    // Predicated region
    $region18: #{tpu_custom_call.1} parent=1 // pred_check
      _
    $region19: #{tpu_custom_call.1} parent=1 // pred_check_branch
      %464 = sbr.rel (0) target = $region21
    $region20: #{tpu_custom_call.1} parent=1 // pred_region
      %466 = vsyncadd [#allocation6], 0
      %s468 = sshll.u32 [#allocation7], 4
      %s469 = int_to_ptr.vmem [resolvable:$true] %s468
      %s470 = sshll.u32 %s1, 4
      %s471 = int_to_ptr.hbm [resolvable:$true] %s470
      %473 = dma.vmem_to_hbm [thread:$0]  %s469, 32, %s471, [#allocation6]
    $region21: #{tpu_custom_call.1} parent=1 // pred_fallthru
      _
    // Predicated region
    $region22: #{tpu_custom_call.1} parent=1 // pred_check
      _
    $region23: #{tpu_custom_call.1} parent=1 // pred_check_branch
      %475 = sbr.rel (0) target = $region25
    $region24: #{tpu_custom_call.1} parent=1 // pred_region
      %477 = vsyncadd [#allocation9], 0
      %s479 = sshll.u32 [#allocation8], 4
      %s480 = int_to_ptr.vmem [resolvable:$true] %s479
      %s481 = sshll.u32 %s2, 4
      %s482 = int_to_ptr.hbm [resolvable:$true] %s481
      %484 = dma.vmem_to_hbm [thread:$0]  %s480, 32, %s482, [#allocation9]
    $region25: #{tpu_custom_call.1} parent=1 // pred_fallthru
      _
    // Predicated region
    $region26: #{tpu_custom_call.1} parent=1 // pred_check
      _
    $region27: #{tpu_custom_call.1} parent=1 // pred_check_branch
      %486 = sbr.rel (0) target = $region29
    $region28: #{tpu_custom_call.1} parent=1 // pred_region
      %488 = dma.done [#allocation6], 32
    $region29: #{tpu_custom_call.1} parent=1 // pred_fallthru
      _
    // Predicated region
    $region30: #{tpu_custom_call.1} parent=1 // pred_check
      _
    $region31: #{tpu_custom_call.1} parent=1 // pred_check_branch
      %490 = sbr.rel (0) target = $region33
    $region32: #{tpu_custom_call.1} parent=1 // pred_region
      %492 = dma.done [#allocation9], 32
    $region33: #{tpu_custom_call.1} parent=1 // pred_fallthru
      _
    %493 = vsyncpa [#allocation5], 1
    %494 = vsyncpa [#allocation6], 1
    %495 = vsyncpa [#allocation9], 1

</llo_original>
